<compile_context>
chip_gen: v7x
topology: tpu7x:2x2x1
jax: 0.10.0
libtpu: 0.0.40
codegen_flags: <defaults>
</compile_context>

<pallas_src>
import jax
import jax.numpy as jnp
import numpy as np
from jax import lax
from jax.experimental import pallas as pl
from jax.experimental.pallas import tpu as pltpu

BN_EPS = 1e-5
_INV_SQRT2 = np.float32(1.0 / np.sqrt(2.0))


def _round_up(x, m):
    return ((x + m - 1) // m) * m


def _predictor_kernel(x_ref, w1_ref, gb_ref, w2_ref, o_ref):
    """One F-tile: fc1 -> BN(train) -> GELU -> accumulate fc2 into resident output."""
    k = pl.program_id(0)

    @pl.when(k == 0)
    def _():
        o_ref[...] = jnp.zeros_like(o_ref)

    # ---- fc1 tile: (B, Dp) @ (Dp, tF) -> (B, tF); bf16 operands, f32 MXU accumulation.
    h = jnp.dot(x_ref[...], w1_ref[...], preferred_element_type=jnp.float32)

    # ---- BatchNorm1d (training-mode batch stats, per feature) — two-pass for stability.
    inv_b = np.float32(1.0 / x_ref.shape[0])
    mean = jnp.sum(h, axis=0, keepdims=True) * inv_b
    d = h - mean
    var = jnp.sum(d * d, axis=0, keepdims=True) * inv_b           # biased variance
    scale = gb_ref[0:1, :] * lax.rsqrt(var + np.float32(BN_EPS))  # gamma folded in
    h = d * scale + gb_ref[1:2, :]                                # + beta

    # ---- GELU (exact, erf-based), kept in f32.
    h = 0.5 * h * (1.0 + lax.erf(h * _INV_SQRT2))

    # ---- fc2 tile: accumulate (B, tF) @ (tF, Op) directly into the resident f32 output.
    o_ref[...] += jnp.dot(h.astype(jnp.bfloat16), w2_ref[...],
                          preferred_element_type=jnp.float32)


def _step_vmem_footprint(B, Dp, tile_f, Op):
    """Approx per-step VMEM bytes for a given F tile (double-buffered inputs)."""
    return (2 * 2 * (Dp * tile_f + tile_f * Op)   # bf16 w1/w2 tiles, 2 buffers each
            + 2 * 4 * 2 * tile_f                  # f32 (2, tile_f) gamma/beta, 2 buffers
            + 2 * 2 * B * Dp                      # bf16 x tile (conservatively 2 buffers)
            + 4 * B * Op                          # resident f32 output block
            + 3 * 4 * B * tile_f)                 # f32 intermediates (h, centered, gelu)


def text_embedding_predictor(x, w1, gamma, beta, w2, *, tile_f=None):
    """Fused fc1 -> BatchNorm1d(train) -> GELU -> fc2.

    x: (B, d_model).  w1: (d_model, ffn) and w2: (ffn, out) are the Linear weights
    pre-transposed to (in, out), no bias.  gamma/beta: (ffn,) BN affine.

    Note: with small B (e.g. 8) this op is weight-streaming / HBM bound — only a few
    MXU rows are used.  Batch multiple requests (B >= 128) for MXU-bound throughput.
    """
    B, D = x.shape
    F = w1.shape[1]
    O = w2.shape[1]
    out_dtype = x.dtype

    # Lane-dense padding (multiples of 128) of contraction / feature axes.
    Dp = _round_up(D, 128)
    Op = _round_up(O, 128)

    # Per-generation VMEM budget; derive tile_f and the scoped limit from the footprint.
    try:
        vmem_cap = pltpu.get_tpu_info().vmem_capacity_bytes
    except Exception:
        vmem_cap = 64 * 1024 * 1024
    vmem_budget = min(int(vmem_cap * 3 // 4), 96 * 1024 * 1024)

    if tile_f is None:
        tile_f = min(_round_up(F, 128), 2048)
        while tile_f > 128 and _step_vmem_footprint(B, Dp, tile_f, Op) > vmem_budget:
            tile_f -= 128
    tile_f = _round_up(tile_f, 128)
    Fp = _round_up(F, tile_f)

    vmem_limit = int(min(vmem_budget,
                         max(_step_vmem_footprint(B, Dp, tile_f, Op) + (4 << 20),
                             16 << 20)))

    # Fuse gamma/beta into a single (2, Fp) f32 array (one small DMA per step).
    gb = jnp.stack([jnp.asarray(gamma, jnp.float32),
                    jnp.asarray(beta, jnp.float32)], axis=0)
    gb_p = jnp.pad(gb, ((0, 0), (0, Fp - F)))
    gb_p = gb_p.at[0, F:].set(1.0)   # padded gamma = 1 (padded features stay exactly 0)

    # Cast to bf16 in the wrapper, then pad (halves x/weight DMA; f32 MXU accumulation).
    x_p = jnp.pad(x.astype(jnp.bfloat16), ((0, 0), (0, Dp - D)))
    w1_p = jnp.pad(w1.astype(jnp.bfloat16), ((0, Dp - D), (0, Fp - F)))
    w2_p = jnp.pad(w2.astype(jnp.bfloat16), ((0, Fp - F), (0, Op - O)))

    grid = (Fp // tile_f,)   # single F-reduction axis; output block resident across it

    cost = pl.CostEstimate(
        flops=2 * B * (Dp * Fp + Fp * Op),
        transcendentals=B * Fp,
        bytes_accessed=int(x_p.size * 2 + w1_p.size * 2 + w2_p.size * 2
                           + gb_p.size * 4 + B * Op * 4),
    )

    out_p = pl.pallas_call(
        _predictor_kernel,
        out_shape=jax.ShapeDtypeStruct((B, Op), jnp.float32),
        grid=grid,
        in_specs=[
            pl.BlockSpec((B, Dp), lambda k: (0, 0)),          # x: resident
            pl.BlockSpec((Dp, tile_f), lambda k: (0, k)),     # w1 F-tile
            pl.BlockSpec((2, tile_f), lambda k: (0, k)),      # gamma/beta F-tile
            pl.BlockSpec((tile_f, Op), lambda k: (k, 0)),     # w2 F-tile
        ],
        out_specs=pl.BlockSpec((B, Op), lambda k: (0, 0)),    # resident f32 accumulator
        compiler_params=pltpu.CompilerParams(
            dimension_semantics=("arbitrary",),
            vmem_limit_bytes=vmem_limit,
        ),
        cost_estimate=cost,
    )(x_p, w1_p, gb_p, w2_p)

    return out_p[:, :O].astype(out_dtype)


def _reference_f32(x, w1, gamma, beta, w2):
    """Pure f32 PyTorch-semantics reference (train-mode BN, exact GELU)."""
    h = x @ w1
    mean = jnp.mean(h, axis=0, keepdims=True)
    var = jnp.mean((h - mean) ** 2, axis=0, keepdims=True)
    h = (h - mean) / jnp.sqrt(var + BN_EPS)
    h = h * gamma.reshape(1, -1) + beta.reshape(1, -1)
    h = 0.5 * h * (1.0 + lax.erf(h * np.float32(1.0 / np.sqrt(2.0))))
    return h @ w2


def _reference_mixed(x, w1, gamma, beta, w2):
    """Mirrors the kernel's precision choices (bf16 matmul operands, f32 elsewhere)."""
    h = jnp.dot(x.astype(jnp.bfloat16), w1.astype(jnp.bfloat16),
                preferred_element_type=jnp.float32)
    mean = jnp.mean(h, axis=0, keepdims=True)
    d = h - mean
    var = jnp.mean(d * d, axis=0, keepdims=True)
    scale = gamma.reshape(1, -1) * lax.rsqrt(var + np.float32(BN_EPS))
    h = d * scale + beta.reshape(1, -1)
    h = 0.5 * h * (1.0 + lax.erf(h * np.float32(1.0 / np.sqrt(2.0))))
    return jnp.dot(h.astype(jnp.bfloat16), w2.astype(jnp.bfloat16),
                   preferred_element_type=jnp.float32)


if __name__ == "__main__":
    # Small config consistent with the BartConfig fields used by the module.
    batch = 8          # BatchNorm1d training mode needs N > 1
    d_model = 32
    ffn_dim = 384      # config.embed_predictor_ffn_dim
    out_dim = 64       # config.embed_predictor_out_dim
    tile_f = 128       # small tile so the F-axis accumulation path is exercised

    key = jax.random.PRNGKey(0)
    kx, k1, k2, kg, kb = jax.random.split(key, 5)

    x = jax.random.normal(kx, (batch, d_model), dtype=jnp.float32)
    w1 = jax.random.normal(k1, (d_model, ffn_dim), dtype=jnp.float32) * np.float32(
        1.0 / np.sqrt(d_model))
    w2 = jax.random.normal(k2, (ffn_dim, out_dim), dtype=jnp.float32) * np.float32(
        1.0 / np.sqrt(ffn_dim))
    gamma = 0.5 + jax.random.uniform(kg, (ffn_dim,), dtype=jnp.float32)   # BN weight
    beta = 0.1 * jax.random.normal(kb, (ffn_dim,), dtype=jnp.float32)     # BN bias

    out = text_embedding_predictor(x, w1, gamma, beta, w2, tile_f=tile_f)
    out = jax.block_until_ready(out)

    # Default tile selection path (no explicit tile_f) should also run.
    out_auto = text_embedding_predictor(x, w1, gamma, beta, w2)
    out_auto = jax.block_until_ready(out_auto)

    # Check against a reference mirroring the kernel's bf16/f32 precision choices.
    ref_mixed = _reference_mixed(x, w1, gamma, beta, w2)
    np.testing.assert_allclose(np.asarray(out), np.asarray(ref_mixed),
                               rtol=2e-3, atol=2e-3)
    np.testing.assert_allclose(np.asarray(out_auto), np.asarray(ref_mixed),
                               rtol=2e-3, atol=2e-3)

    # Semantic sanity vs. the pure f32 module forward (loose tol: bf16 weights).
    ref_f32 = _reference_f32(x, w1, gamma, beta, w2)
    np.testing.assert_allclose(np.asarray(out), np.asarray(ref_f32),
                               rtol=5e-2, atol=5e-2)

    print("KERNEL_OK")
</pallas_src>

<mosaic_0001>
module attributes {stable_mosaic.version = 11 : i64} {
  func.func @_predictor_kernel(%arg0: i32, %arg1: memref<8x128xbf16, #tpu.memory_space<vmem>>, %arg2: memref<128x128xbf16, #tpu.memory_space<vmem>>, %arg3: memref<2x128xf32, #tpu.memory_space<vmem>>, %arg4: memref<128x128xbf16, #tpu.memory_space<vmem>>, %arg5: memref<8x128xf32, #tpu.memory_space<vmem>>) attributes {dimension_semantics = [#tpu.dimension_semantics<arbitrary>], iteration_bounds = array<i64: 3>, scalar_prefetch = 0 : i64, scratch_operands = 0 : i64, tpu.core_type = #tpu.core_type<tc>, window_params = [{pipeline_mode = #tpu.pipeline_mode<synchronous>, transform_indices = @transform_0, window_bounds = array<i64: 8, 128>}, {transform_indices = @transform_1, window_bounds = array<i64: 128, 128>}, {transform_indices = @transform_2, window_bounds = array<i64: 2, 128>}, {transform_indices = @transform_3, window_bounds = array<i64: 128, 128>}, {pipeline_mode = #tpu.pipeline_mode<synchronous>, transform_indices = @transform_4, window_bounds = array<i64: 8, 128>}]} {
    %c0_i32 = arith.constant 0 : i32
    %0 = arith.cmpi eq, %arg0, %c0_i32 : i32
    %1 = arith.extui %0 : i1 to i32
    %c0_i32_0 = arith.constant 0 : i32
    %2 = arith.cmpi ne, %1, %c0_i32_0 : i32
    scf.if %2 {
      %cst_22 = arith.constant 0.000000e+00 : f32
      %41 = vector.broadcast %cst_22 : f32 to vector<8x128xf32>
      %c0_23 = arith.constant 0 : index
      %c0_24 = arith.constant 0 : index
      %42 = vector.load %arg5[%c0_23, %c0_24] : memref<8x128xf32, #tpu.memory_space<vmem>>, vector<8x128xf32>
      tpu.vector_store %arg5[%c0_23, %c0_24], %41 {strides = array<i32>} : memref<8x128xf32, #tpu.memory_space<vmem>>, vector<8x128xf32>,
    } else {
    }
    %c0 = arith.constant 0 : index
    %c0_1 = arith.constant 0 : index
    %3 = vector.load %arg1[%c0, %c0_1] : memref<8x128xbf16, #tpu.memory_space<vmem>>, vector<8x128xbf16>
    %c0_2 = arith.constant 0 : index
    %c0_3 = arith.constant 0 : index
    %4 = vector.load %arg2[%c0_2, %c0_3] : memref<128x128xbf16, #tpu.memory_space<vmem>>, vector<128x128xbf16>
    %cst = arith.constant dense<0.000000e+00> : vector<8x128xf32>
    %5 = tpu.matmul %3, %4, %cst {dimension_numbers = #tpu.dot_dimension_numbers<[1], [0], [0], [1], [0, 0, 1, 1], [], []>} : vector<8x128xbf16>, vector<128x128xbf16>, vector<8x128xf32> -> vector<8x128xf32>
    %cst_4 = arith.constant dense<0.000000e+00> : vector<128xf32>
    %6 = vector.multi_reduction <add>, %5, %cst_4 [0] : vector<8x128xf32> to vector<128xf32>
    %7 = vector.shape_cast %6 : vector<128xf32> to vector<1x128xf32>
    %cst_5 = arith.constant 1.250000e-01 : f32
    %8 = vector.broadcast %cst_5 : f32 to vector<1x128xf32>
    %9 = arith.mulf %7, %8 : vector<1x128xf32>
    %10 = vector.broadcast %9 : vector<1x128xf32> to vector<8x128xf32>
    %11 = arith.subf %5, %10 : vector<8x128xf32>
    %12 = arith.mulf %11, %11 : vector<8x128xf32>
    %cst_6 = arith.constant dense<0.000000e+00> : vector<128xf32>
    %13 = vector.multi_reduction <add>, %12, %cst_6 [0] : vector<8x128xf32> to vector<128xf32>
    %14 = vector.shape_cast %13 : vector<128xf32> to vector<1x128xf32>
    %cst_7 = arith.constant 1.250000e-01 : f32
    %15 = vector.broadcast %cst_7 : f32 to vector<1x128xf32>
    %16 = arith.mulf %14, %15 : vector<1x128xf32>
    %c0_8 = arith.constant 0 : index
    %c0_9 = arith.constant 0 : index
    %17 = vector.load %arg3[%c0_8, %c0_9] : memref<2x128xf32, #tpu.memory_space<vmem>>, vector<1x128xf32>
    %cst_10 = arith.constant 9.99999974E-6 : f32
    %18 = vector.broadcast %cst_10 : f32 to vector<1x128xf32>
    %19 = arith.addf %16, %18 : vector<1x128xf32>
    %20 = math.rsqrt %19 : vector<1x128xf32>
    %21 = arith.mulf %17, %20 : vector<1x128xf32>
    %22 = vector.broadcast %21 : vector<1x128xf32> to vector<8x128xf32>
    %23 = arith.mulf %11, %22 : vector<8x128xf32>
    %c1 = arith.constant 1 : index
    %c0_11 = arith.constant 0 : index
    %24 = vector.load %arg3[%c1, %c0_11] : memref<2x128xf32, #tpu.memory_space<vmem>>, vector<1x128xf32>
    %25 = vector.broadcast %24 : vector<1x128xf32> to vector<8x128xf32>
    %26 = arith.addf %23, %25 : vector<8x128xf32>
    %cst_12 = arith.constant 5.000000e-01 : f32
    %27 = vector.broadcast %cst_12 : f32 to vector<8x128xf32>
    %28 = arith.mulf %27, %26 : vector<8x128xf32>
    %cst_13 = arith.constant 0.707106769 : f32
    %29 = vector.broadcast %cst_13 : f32 to vector<8x128xf32>
    %30 = arith.mulf %26, %29 : vector<8x128xf32>
    %31 = math.erf %30 : vector<8x128xf32>
    %cst_14 = arith.constant 1.000000e+00 : f32
    %32 = vector.broadcast %cst_14 : f32 to vector<8x128xf32>
    %33 = arith.addf %32, %31 : vector<8x128xf32>
    %34 = arith.mulf %28, %33 : vector<8x128xf32>
    %c0_15 = arith.constant 0 : index
    %c0_16 = arith.constant 0 : index
    %35 = vector.load %arg5[%c0_15, %c0_16] : memref<8x128xf32, #tpu.memory_space<vmem>>, vector<8x128xf32>
    %36 = arith.truncf %34 : vector<8x128xf32> to vector<8x128xbf16>
    %c0_17 = arith.constant 0 : index
    %c0_18 = arith.constant 0 : index
    %37 = vector.load %arg4[%c0_17, %c0_18] : memref<128x128xbf16, #tpu.memory_space<vmem>>, vector<128x128xbf16>
    %cst_19 = arith.constant dense<0.000000e+00> : vector<8x128xf32>
    %38 = tpu.matmul %36, %37, %cst_19 {dimension_numbers = #tpu.dot_dimension_numbers<[1], [0], [0], [1], [0, 0, 1, 1], [], []>} : vector<8x128xbf16>, vector<128x128xbf16>, vector<8x128xf32> -> vector<8x128xf32>
    %39 = arith.addf %35, %38 : vector<8x128xf32>
    %c0_20 = arith.constant 0 : index
    %c0_21 = arith.constant 0 : index
    %40 = vector.load %arg5[%c0_20, %c0_21] : memref<8x128xf32, #tpu.memory_space<vmem>>, vector<8x128xf32>
    tpu.vector_store %arg5[%c0_20, %c0_21], %39 {strides = array<i32>} : memref<8x128xf32, #tpu.memory_space<vmem>>, vector<8x128xf32>,
    return
  }
  func.func @transform_0(%arg0: i32) -> (i32, i32) {
    %c0_i32 = arith.constant 0 : i32
    %c0_i32_0 = arith.constant 0 : i32
    %c0_i32_1 = arith.constant 0 : i32
    return %c0_i32, %c0_i32_0 : i32, i32
  }
  func.func @transform_1(%arg0: i32) -> (i32, i32) {
    %c0_i32 = arith.constant 0 : i32
    %c0_i32_0 = arith.constant 0 : i32
    return %c0_i32, %arg0 : i32, i32
  }
  func.func @transform_2(%arg0: i32) -> (i32, i32) {
    %c0_i32 = arith.constant 0 : i32
    %c0_i32_0 = arith.constant 0 : i32
    return %c0_i32, %arg0 : i32, i32
  }
  func.func @transform_3(%arg0: i32) -> (i32, i32) {
    %c0_i32 = arith.constant 0 : i32
    %c0_i32_0 = arith.constant 0 : i32
    return %arg0, %c0_i32 : i32, i32
  }
  func.func @transform_4(%arg0: i32) -> (i32, i32) {
    %c0_i32 = arith.constant 0 : i32
    %c0_i32_0 = arith.constant 0 : i32
    %c0_i32_1 = arith.constant 0 : i32
    return %c0_i32, %c0_i32_0 : i32, i32
  }
}

</mosaic_0001>

<llo_original>
// kernel: tpu_custom_call.1
$region0: #{tpu_custom_call.1}
  #allocation0 [shape = 'u32[]', space=smem, size = 0x4, offset = 0x4, fixed_abs, tag = 'smem constant byte address 0x4 - core index']
  #allocation1 [shape = 'u32[144,128]{1,0:T(1,128)}', space=vmem, size = 0x12000, scoped, tag = 'internal scratch']
  %s0 = inlined_call_operand.hbm [shape: bf16[8,128], index: 0, kind: input, shape index: {}]
  %s1 = inlined_call_operand.hbm [shape: bf16[128,384], index: 1, kind: input, shape index: {}]
  %s2 = inlined_call_operand.vmem [shape: f32[2,384], index: 2, kind: input, shape index: {}]
  %s3 = inlined_call_operand.hbm [shape: bf16[384,128], index: 3, kind: input, shape index: {}]
  %s4 = inlined_call_operand.hbm [shape: f32[8,128], index: 4, kind: output, shape index: {}]
  %s5 = sld [smem:[#allocation0]]
  $region65: #{tpu_custom_call.1} parent=0
    _
  %s7 = ssub.s32 1, %s5
  %s8 = scalar_select 0, %s7, %s5
  $region1: #{tpu_custom_call.1} parent=0
    #allocation2 [shape = 'u8[2048]{0}', space=vmem, size = 0x800, scoped, tag = 'input window, operand 0, single buffered']
    #allocation3 [shape = 's32[2]{0}', space=sflag, size = 0x8, scoped, tag = 'scoped memory for tpu_custom_call.1']
    #allocation4 [shape = 's32[2]{0}', space=sflag, size = 0x8, scoped, tag = 'scoped memory for tpu_custom_call.1']
    #allocation5 [shape = 'u8[65536]{0}', space=vmem, size = 0x10000, scoped, tag = 'input window, operand 1']
    #allocation6 [shape = 's32[2]{0}', space=sflag, size = 0x8, scoped, tag = 'scoped memory for tpu_custom_call.1']
    #allocation7 [shape = 'u8[65536]{0}', space=vmem, size = 0x10000, scoped, tag = 'input window, operand 3']
    #allocation8 [shape = 'u8[4096]{0}', space=vmem, size = 0x1000, scoped, tag = 'output window, operand 0, single buffered']
    %9 = vsyncpa [#allocation3], 0
    %10 = vsyncpa [#allocation6], 0
    %s11 = scalar_lea.sflag [#allocation6], 1
    %12 = vsyncpa %s11, 0
    %13 = vsyncpa [#allocation4], 0
    loop: start=0, step=1, limit=5
    $region2: #{tpu_custom_call.1} parent=1 // loop_pre_header
      _
    $region3: #{tpu_custom_call.1} parent=1 // loop_header
      %s15 = sphi 0, %s19
      %p16 = scmp.ge.s32.totalorder %s15, 5
      %s23 = sphi 0, %s23
      %s25 = sphi 0, %s23
      %s26 = sphi 0, %s25
      %s40 = sphi 0, %s26
      %s46 = sphi 0, %s48
      %s49 = sphi 0, %s46
      %s50 = sphi 0, %s49
      %s66 = sphi 0, %s50
      %s72 = sphi 0, %s74
      %s75 = sphi 0, %s72
      %s76 = sphi 0, %s75
      %s92 = sphi 0, %s76
      %s98 = sphi 0, %s100
      %s101 = sphi 0, %s98
      %s102 = sphi 0, %s101
      %s118 = sphi 0, %s102
      %s122 = sphi 0, %s122
      %s124 = sphi 0, %s122
      %s125 = sphi 0, %s124
      %s139 = sphi 0, %s125
    $region4: #{tpu_custom_call.1} parent=1 // loop_header_branch
      %18 = sbr.rel (%p16) target = $region8
    $region5: #{tpu_custom_call.1} parent=1 // loop_body
      %s20 = ssub.s32 %s15, 1
      %s21 = ssub.s32 %s15, 2
      %s22 = sadd.s32 %s15, 1
      %s24 = sadd.s32 %s23, 1
      %p27 = scmp.eq.s32.totalorder %s15, 2
      %p28 = scmp.ne.s32.totalorder %s23, %s25
      %p29 = scmp.eq.s32.totalorder %s15, 0
      %p30 = por %p28, %p29
      %p31 = scmp.ne.s32.totalorder %s23, %s25
      %p32 = scmp.eq.s32.totalorder %s20, 2
      %p33 = por %p31, %p32
      %p34 = scmp.ne.s32.totalorder %s25, %s26
      %p35 = scmp.eq.s32.totalorder %s20, 0
      %p36 = por %p34, %p35
      %p37 = scmp.ne.s32.totalorder %s25, %s26
      %p38 = scmp.eq.s32.totalorder %s21, 2
      %p39 = por %p37, %p38
      %p41 = scmp.ne.s32.totalorder %s26, %s40
      %p42 = scmp.eq.s32.totalorder %s21, 0
      %p43 = por %p41, %p42
      %s44 = ssub.s32 %s15, %s22
      %p45 = scmp.eq.s32.totalorder %s44, 0
      %s47 = sadd.s32 %s46, 1
      %s48 = scalar_select %p45, %s46, %s47
      %p51 = pneg %p45
      %p52 = scmp.eq.s32.totalorder %s15, 2
      %p53 = por %p51, %p52
      %p54 = scmp.ne.s32.totalorder %s46, %s49
      %p55 = scmp.eq.s32.totalorder %s15, 0
      %p56 = por %p54, %p55
      %p57 = scmp.ne.s32.totalorder %s46, %s49
      %p58 = scmp.eq.s32.totalorder %s20, 2
      %p59 = por %p57, %p58
      %p60 = scmp.ne.s32.totalorder %s49, %s50
      %p61 = scmp.eq.s32.totalorder %s20, 0
      %p62 = por %p60, %p61
      %p63 = scmp.ne.s32.totalorder %s49, %s50
      %p64 = scmp.eq.s32.totalorder %s21, 2
      %p65 = por %p63, %p64
      %p67 = scmp.ne.s32.totalorder %s50, %s66
      %p68 = scmp.eq.s32.totalorder %s21, 0
      %p69 = por %p67, %p68
      %s70 = ssub.s32 %s15, %s22
      %p71 = scmp.eq.s32.totalorder %s70, 0
      %s73 = sadd.s32 %s72, 1
      %s74 = scalar_select %p71, %s72, %s73
      %p77 = pneg %p71
      %p78 = scmp.eq.s32.totalorder %s15, 2
      %p79 = por %p77, %p78
      %p80 = scmp.ne.s32.totalorder %s72, %s75
      %p81 = scmp.eq.s32.totalorder %s15, 0
      %p82 = por %p80, %p81
      %p83 = scmp.ne.s32.totalorder %s72, %s75
      %p84 = scmp.eq.s32.totalorder %s20, 2
      %p85 = por %p83, %p84
      %p86 = scmp.ne.s32.totalorder %s75, %s76
      %p87 = scmp.eq.s32.totalorder %s20, 0
      %p88 = por %p86, %p87
      %p89 = scmp.ne.s32.totalorder %s75, %s76
      %p90 = scmp.eq.s32.totalorder %s21, 2
      %p91 = por %p89, %p90
      %p93 = scmp.ne.s32.totalorder %s76, %s92
      %p94 = scmp.eq.s32.totalorder %s21, 0
      %p95 = por %p93, %p94
      %s96 = ssub.s32 %s15, %s22
      %p97 = scmp.eq.s32.totalorder %s96, 0
      %s99 = sadd.s32 %s98, 1
      %s100 = scalar_select %p97, %s98, %s99
      %p103 = pneg %p97
      %p104 = scmp.eq.s32.totalorder %s15, 2
      %p105 = por %p103, %p104
      %p106 = scmp.ne.s32.totalorder %s98, %s101
      %p107 = scmp.eq.s32.totalorder %s15, 0
      %p108 = por %p106, %p107
      %p109 = scmp.ne.s32.totalorder %s98, %s101
      %p110 = scmp.eq.s32.totalorder %s20, 2
      %p111 = por %p109, %p110
      %p112 = scmp.ne.s32.totalorder %s101, %s102
      %p113 = scmp.eq.s32.totalorder %s20, 0
      %p114 = por %p112, %p113
      %p115 = scmp.ne.s32.totalorder %s101, %s102
      %p116 = scmp.eq.s32.totalorder %s21, 2
      %p117 = por %p115, %p116
      %p119 = scmp.ne.s32.totalorder %s102, %s118
      %p120 = scmp.eq.s32.totalorder %s21, 0
      %p121 = por %p119, %p120
      %s123 = sadd.s32 %s122, 1
      %p126 = scmp.eq.s32.totalorder %s15, 2
      %p127 = scmp.ne.s32.totalorder %s122, %s124
      %p128 = scmp.eq.s32.totalorder %s15, 0
      %p129 = por %p127, %p128
      %p130 = scmp.ne.s32.totalorder %s122, %s124
      %p131 = scmp.eq.s32.totalorder %s20, 2
      %p132 = por %p130, %p131
      %p133 = scmp.ne.s32.totalorder %s124, %s125
      %p134 = scmp.eq.s32.totalorder %s20, 0
      %p135 = por %p133, %p134
      %p136 = scmp.ne.s32.totalorder %s124, %s125
      %p137 = scmp.eq.s32.totalorder %s21, 2
      %p138 = por %p136, %p137
      %p140 = scmp.ne.s32.totalorder %s125, %s139
      %p141 = scmp.eq.s32.totalorder %s21, 0
      %p142 = por %p140, %p141
      %p143 = scmp.le.s32.totalorder 1, %s15
      %p144 = scmp.lt.s32.totalorder %s15, 4
      %p145 = pnand %p143, %p144
      %p146 = pneg %p145
      // Predicated region
      $region9: #{tpu_custom_call.1} parent=5 // pred_check
        _
      $region10: #{tpu_custom_call.1} parent=5 // pred_check_branch
        %148 = sbr.rel (%p145) target = $region12
      $region11: #{tpu_custom_call.1} parent=5 // pred_region
        %s149 = ssub.s32 %s15, 1
        // Predicated region
        $region13: #{tpu_custom_call.1} parent=11 // pred_check
          %p150 = pneg %p36
        $region14: #{tpu_custom_call.1} parent=11 // pred_check_branch
          %152 = sbr.rel (%p150) target = $region16
        $region15: #{tpu_custom_call.1} parent=11 // pred_region
          %s154 = ssub.s32 64, 64
          %155 = vsyncadd [#allocation3], %s154
          %s157 = sshll.u32 [#allocation2], 4
          %s158 = int_to_ptr.vmem [resolvable:$true] %s157
          %160 = dma.hbm_to_vmem [thread:$0]  %s0, 64, %s158, [#allocation3]
        $region16: #{tpu_custom_call.1} parent=11 // pred_fallthru
          _
      $region12: #{tpu_custom_call.1} parent=5 // pred_fallthru
        _
      %p161 = scmp.lt.s32.totalorder %s15, 3
      // Predicated region
      $region17: #{tpu_custom_call.1} parent=5 // pred_check
        %p162 = pneg %p161
      $region18: #{tpu_custom_call.1} parent=5 // pred_check_branch
        %164 = sbr.rel (%p162) target = $region20
      $region19: #{tpu_custom_call.1} parent=5 // pred_region
        // Predicated region
        $region21: #{tpu_custom_call.1} parent=19 // pred_check
          %p165 = pneg %p56
        $region22: #{tpu_custom_call.1} parent=19 // pred_check_branch
          %167 = sbr.rel (%p165) target = $region24
        $region23: #{tpu_custom_call.1} parent=19 // pred_region
          %s168 = sand.u32 %s15, 1
          %s169 = scalar_lea.sflag [#allocation6], %s168
          %s170 = sand.u32 %s46, 1
          %s171 = smul.addr %s170, 64
          %s172 = scalar_lea.vmem [#allocation5], %s171
          %s174 = ssub.s32 1024, 1024
          %175 = vsyncadd %s169, %s174
          %s176 = smul.addr %s15, 64
          %s177 = scalar_lea.hbm %s1, %s176
          %s178 = sshll.u32 %s172, 4
          %s179 = int_to_ptr.vmem [resolvable:$true] %s178
          %184 = dma.hbm_to_vmem [thread:$0]  %s177, 1024, %s179, %s169, 192, 64, 4
        $region24: #{tpu_custom_call.1} parent=19 // pred_fallthru
          _
        // Predicated region
        $region25: #{tpu_custom_call.1} parent=19 // pred_check
          %p185 = pneg %p82
        $region26: #{tpu_custom_call.1} parent=19 // pred_check_branch
          %187 = sbr.rel (%p185) target = $region28
        $region27: #{tpu_custom_call.1} parent=19 // pred_region
          %p188 = scmp.lt.s32.totalorder %s15, 2
          %s189 = scalar_select %p188, %s15, 2
          %s190 = smul.addr %s189, 2
          %s191 = scalar_lea.vmem %s2, %s190
        $region28: #{tpu_custom_call.1} parent=19 // pred_fallthru
          _
        // Predicated region
        $region29: #{tpu_custom_call.1} parent=19 // pred_check
          %p192 = pneg %p108
        $region30: #{tpu_custom_call.1} parent=19 // pred_check_branch
          %194 = sbr.rel (%p192) target = $region32
        $region31: #{tpu_custom_call.1} parent=19 // pred_region
          %s195 = sand.u32 %s15, 1
          %s196 = scalar_lea.sflag [#allocation6], %s195
          %s197 = sand.u32 %s98, 1
          %s198 = smul.addr %s197, 64
          %s199 = scalar_lea.vmem [#allocation7], %s198
          %s200 = smul.u32 16, %s15
          %s202 = ssub.s32 1024, 1024
          %203 = vsyncadd %s196, %s202
          %s204 = smul.addr %s200, 64
          %s205 = scalar_lea.hbm %s3, %s204
          %s206 = sshll.u32 %s199, 4
          %s207 = int_to_ptr.vmem [resolvable:$true] %s206
          %212 = dma.hbm_to_vmem [thread:$0]  %s205, 1024, %s207, %s196, 64, 64, 4
        $region32: #{tpu_custom_call.1} parent=19 // pred_fallthru
          _
      $region20: #{tpu_custom_call.1} parent=5 // pred_fallthru
        _
      %p213 = scmp.le.s32.totalorder 1, %s15
      %p214 = scmp.lt.s32.totalorder %s15, 4
      %p215 = pnand %p213, %p214
      %p216 = pneg %p215
      // Predicated region
      $region33: #{tpu_custom_call.1} parent=5 // pred_check
        _
      $region34: #{tpu_custom_call.1} parent=5 // pred_check_branch
        %218 = sbr.rel (%p215) target = $region36
      $region35: #{tpu_custom_call.1} parent=5 // pred_region
        %s219 = ssub.s32 %s15, 1
        // Predicated region
        $region37: #{tpu_custom_call.1} parent=35 // pred_check
          %p220 = pneg %p36
        $region38: #{tpu_custom_call.1} parent=35 // pred_check_branch
          %222 = sbr.rel (%p220) target = $region40
        $region39: #{tpu_custom_call.1} parent=35 // pred_region
          %223 = dma.done [#allocation3], 64
        $region40: #{tpu_custom_call.1} parent=35 // pred_fallthru
          _
        %s224 = sand.u32 %s20, 1
        %s225 = scalar_lea.sflag [#allocation6], %s224
        %s226 = sand.u32 %s49, 1
        %s227 = smul.addr %s226, 64
        %s228 = scalar_lea.vmem [#allocation5], %s227
        // Predicated region
        $region41: #{tpu_custom_call.1} parent=35 // pred_check
          %p229 = pneg %p62
        $region42: #{tpu_custom_call.1} parent=35 // pred_check_branch
          %231 = sbr.rel (%p229) target = $region44
        $region43: #{tpu_custom_call.1} parent=35 // pred_region
          %232 = dma.done %s225, 1024
        $region44: #{tpu_custom_call.1} parent=35 // pred_fallthru
          _
        %s233 = sand.u32 %s20, 1
        %s234 = scalar_lea.sflag [#allocation6], %s233
        %s235 = sand.u32 %s101, 1
        %s236 = smul.addr %s235, 64
        %s237 = scalar_lea.vmem [#allocation7], %s236
        // Predicated region
        $region45: #{tpu_custom_call.1} parent=35 // pred_check
          %p238 = pneg %p114
        $region46: #{tpu_custom_call.1} parent=35 // pred_check_branch
          %240 = sbr.rel (%p238) target = $region48
        $region47: #{tpu_custom_call.1} parent=35 // pred_region
          %241 = dma.done %s234, 1024
        $region48: #{tpu_custom_call.1} parent=35 // pred_fallthru
          _
        %p242 = pneg %p36
        %p243 = pneg %p33
        %s244 = sand.u32 %s20, 1
        %s245 = scalar_lea.sflag [#allocation6], %s244
        %s246 = sand.u32 %s49, 1
        %s247 = smul.addr %s246, 64
        %s248 = scalar_lea.vmem [#allocation5], %s247
        %p249 = pneg %p62
        %p250 = pneg %p59
        %p251 = scmp.lt.s32.totalorder %s20, 2
        %s252 = scalar_select %p251, %s20, 2
        %s253 = smul.addr %s252, 2
        %s254 = scalar_lea.vmem %s2, %s253
        %p255 = pneg %p88
        %p256 = pneg %p85
        %s257 = sand.u32 %s20, 1
        %s258 = scalar_lea.sflag [#allocation6], %s257
        %s259 = sand.u32 %s101, 1
        %s260 = smul.addr %s259, 64
        %s261 = scalar_lea.vmem [#allocation7], %s260
        %p262 = pneg %p114
        %p263 = pneg %p111
        %p264 = pneg %p135
        %p265 = pneg %p132
        %p266 = scmp.lt.s32.totalorder %s20, 2
        %s267 = scalar_select %p266, %s20, 2
        %s268 = smul.addr %s267, 2
        %s269 = scalar_lea.vmem %s2, %s268
        %s270 = smul.u32 16, %s20
        %p272 = scmp.eq.s32.totalorder %s20, 0
        // Predicated region
        $region49: #{tpu_custom_call.1} parent=35 // pred_check
          %p273 = pneg %p272
        $region50: #{tpu_custom_call.1} parent=35 // pred_check_branch
          %275 = sbr.rel (%p273) target = $region52
        $region51: #{tpu_custom_call.1} parent=35 // pred_region
          %276 = vst [vmem:[#allocation8] sm:$0xff] 0.0
        $region52: #{tpu_custom_call.1} parent=35 // pred_fallthru
          _
        %v277 = vld [vmem:[#allocation2] sm:$0xf]
        %v278 = vld [vmem:[%s228] sm:$0xf]
        %v279 = vld [vmem:[%s228 + $0x4] sm:$0xf]
        %v280 = vld [vmem:[%s228 + $0x8] sm:$0xf]
        %v281 = vld [vmem:[%s228 + $0xc] sm:$0xf]
        %v282 = vld [vmem:[%s228 + $0x10] sm:$0xf]
        %v283 = vld [vmem:[%s228 + $0x14] sm:$0xf]
        %v284 = vld [vmem:[%s228 + $0x18] sm:$0xf]
        %v285 = vld [vmem:[%s228 + $0x1c] sm:$0xf]
        %v286 = vld [vmem:[%s228 + $0x20] sm:$0xf]
        %v287 = vld [vmem:[%s228 + $0x24] sm:$0xf]
        %v288 = vld [vmem:[%s228 + $0x28] sm:$0xf]
        %v289 = vld [vmem:[%s228 + $0x2c] sm:$0xf]
        %v290 = vld [vmem:[%s228 + $0x30] sm:$0xf]
        %v291 = vld [vmem:[%s228 + $0x34] sm:$0xf]
        %v292 = vld [vmem:[%s228 + $0x38] sm:$0xf]
        %v293 = vld [vmem:[%s228 + $0x3c] sm:$0xf]
        %v310 = vunpack.c.l.b16 %v278
        %v311 = vunpack.c.l.b16 %v279
        %v312 = vunpack.c.l.b16 %v280
        %v313 = vunpack.c.l.b16 %v281
        %v314 = vunpack.c.l.b16 %v282
        %v315 = vunpack.c.l.b16 %v283
        %v316 = vunpack.c.l.b16 %v284
        %v317 = vunpack.c.l.b16 %v285
        %v318 = vunpack.c.l.b16 %v286
        %v319 = vunpack.c.l.b16 %v287
        %v320 = vunpack.c.l.b16 %v288
        %v321 = vunpack.c.l.b16 %v289
        %v322 = vunpack.c.l.b16 %v290
        %v323 = vunpack.c.l.b16 %v291
        %v324 = vunpack.c.l.b16 %v292
        %v325 = vunpack.c.l.b16 %v293
        %v326 = vpack.c.b16 %v311, %v310
        %v327 = vpack.c.b16 %v313, %v312
        %v328 = vpack.c.b16 %v315, %v314
        %v329 = vpack.c.b16 %v317, %v316
        %v330 = vpack.c.b16 %v319, %v318
        %v331 = vpack.c.b16 %v321, %v320
        %v332 = vpack.c.b16 %v323, %v322
        %v333 = vpack.c.b16 %v325, %v324
        %342 = vmatprep.subr.bf16.mxu0 0
        %343 = vmatpush1.bf16.msra.mxu0 %v326
        %344 = vmatprep.subr.bf16.mxu0 0
        %345 = vmatpush1.bf16.msra.mxu0 %v327
        %346 = vmatprep.subr.bf16.mxu0 0
        %347 = vmatpush1.bf16.msra.mxu0 %v328
        %348 = vmatprep.subr.bf16.mxu0 0
        %349 = vmatpush1.bf16.msra.mxu0 %v329
        %350 = vmatprep.subr.bf16.mxu0 0
        %351 = vmatpush1.bf16.msra.mxu0 %v330
        %352 = vmatprep.subr.bf16.mxu0 0
        %353 = vmatpush1.bf16.msra.mxu0 %v331
        %354 = vmatprep.subr.bf16.mxu0 0
        %355 = vmatpush1.bf16.msra.mxu0 %v332
        %356 = vmatprep.subr.bf16.mxu0 0
        %357 = vmatpush1.bf16.msra.mxu0 %v333
        %358 = vmatprep.subr.bf16.mxu0 0
        %359 = vmatpush1.bf16.msra.mxu0 0
        %360 = vmatprep.subr.bf16.mxu0 0
        %361 = vmatpush1.bf16.msra.mxu0 0
        %362 = vmatprep.subr.bf16.mxu0 0
        %363 = vmatpush1.bf16.msra.mxu0 0
        %364 = vmatprep.subr.bf16.mxu0 0
        %365 = vmatpush1.bf16.msra.mxu0 0
        %366 = vmatprep.subr.bf16.mxu0 0
        %367 = vmatpush1.bf16.msra.mxu0 0
        %368 = vmatprep.subr.bf16.mxu0 0
        %369 = vmatpush1.bf16.msra.mxu0 0
        %370 = vmatprep.subr.bf16.mxu0 0
        %371 = vmatpush1.bf16.msra.mxu0 0
        %372 = vmatprep.subr.bf16.mxu0 0
        %373 = vmatpush1.bf16.msra.mxu0 0
        %374 = vmatprep.mubr.bf16.mxu0 0
        %375 = vmatmul.mubr.bf16.gmra.mrb[0].mxu0 %v277
        %v376 = vpop.f32.mrb[0].mxu0
        %v377 = vadd.f32 0.0, %v376
        %v378 = vpop.f32.mrb[0].mxu0
        %v379 = vpop.f32.mrb[0].mxu0
        %v380 = vpop.f32.mrb[0].mxu0
        %381 = vdwg.mxu0
        %v382 = vrot.slane %v377, 4
        %v383 = vadd.f32 %v377, %v382
        %v384 = vrot.slane %v383, 2
        %v385 = vadd.f32 %v383, %v384
        %v386 = vrot.slane %v385, 1
        %v387 = vadd.f32 %v385, %v386
        %v388 = vmul.f32 %v387, 0.125
        %v389 = vsub.f32 %v377, %v388
        %v390 = vmul.f32 %v389, %v389
        %v391 = vrot.slane %v390, 4
        %v392 = vadd.f32 %v390, %v391
        %v393 = vrot.slane %v392, 2
        %v394 = vadd.f32 %v392, %v393
        %v395 = vrot.slane %v394, 1
        %v396 = vadd.f32 %v394, %v395
        %v397 = vmul.f32 %v396, 0.125
        %v398 = vld [vmem:[%s269] sm:$0x1]
        %v399 = vadd.f32 %v397, 1e-05
        %v400 = vrsqrt.pop %v399
        %v401 = vmul.f32 %v398, %v400
        %v402 = vlaneseq
        %v403 = vshrl.u32 %v402, 7
        %v404 = vsub.s32 0, %v403
        %v405 = vrot.slane %v401, %v404
        %v406 = vmul.f32 %v389, %v405
        %v407 = vld [vmem:[%s269 + $0x1] sm:$0x1]
        %v408 = vlaneseq
        %v409 = vshrl.u32 %v408, 7
        %v410 = vsub.s32 0, %v409
        %v411 = vrot.slane %v407, %v410
        %v412 = vadd.f32 %v406, %v411
        %v413 = vmul.f32 %v412, 0.5
        %v414 = vmul.f32 %v412, 0.70710677
        %v415 = verf.f32.pop %v414
        %v416 = vadd.f32 %v415, 1.0
        %v417 = vmul.f32 %v413, %v416
        %v418 = vld [vmem:[#allocation8] sm:$0xff]
        %v419 = vpack.c.bf16 %v417, %v417
        %v420 = vld [vmem:[%s237] sm:$0xf]
        %v421 = vld [vmem:[%s237 + $0x4] sm:$0xf]
        %v422 = vld [vmem:[%s237 + $0x8] sm:$0xf]
        %v423 = vld [vmem:[%s237 + $0xc] sm:$0xf]
        %v424 = vld [vmem:[%s237 + $0x10] sm:$0xf]
        %v425 = vld [vmem:[%s237 + $0x14] sm:$0xf]
        %v426 = vld [vmem:[%s237 + $0x18] sm:$0xf]
        %v427 = vld [vmem:[%s237 + $0x1c] sm:$0xf]
        %v428 = vld [vmem:[%s237 + $0x20] sm:$0xf]
        %v429 = vld [vmem:[%s237 + $0x24] sm:$0xf]
        %v430 = vld [vmem:[%s237 + $0x28] sm:$0xf]
        %v431 = vld [vmem:[%s237 + $0x2c] sm:$0xf]
        %v432 = vld [vmem:[%s237 + $0x30] sm:$0xf]
        %v433 = vld [vmem:[%s237 + $0x34] sm:$0xf]
        %v434 = vld [vmem:[%s237 + $0x38] sm:$0xf]
        %v435 = vld [vmem:[%s237 + $0x3c] sm:$0xf]
        %v452 = vunpack.c.l.b16 %v420
        %v453 = vunpack.c.l.b16 %v421
        %v454 = vunpack.c.l.b16 %v422
        %v455 = vunpack.c.l.b16 %v423
        %v456 = vunpack.c.l.b16 %v424
        %v457 = vunpack.c.l.b16 %v425
        %v458 = vunpack.c.l.b16 %v426
        %v459 = vunpack.c.l.b16 %v427
        %v460 = vunpack.c.l.b16 %v428
        %v461 = vunpack.c.l.b16 %v429
        %v462 = vunpack.c.l.b16 %v430
        %v463 = vunpack.c.l.b16 %v431
        %v464 = vunpack.c.l.b16 %v432
        %v465 = vunpack.c.l.b16 %v433
        %v466 = vunpack.c.l.b16 %v434
        %v467 = vunpack.c.l.b16 %v435
        %v468 = vpack.c.b16 %v453, %v452
        %v469 = vpack.c.b16 %v455, %v454
        %v470 = vpack.c.b16 %v457, %v456
        %v471 = vpack.c.b16 %v459, %v458
        %v472 = vpack.c.b16 %v461, %v460
        %v473 = vpack.c.b16 %v463, %v462
        %v474 = vpack.c.b16 %v465, %v464
        %v475 = vpack.c.b16 %v467, %v466
        %484 = vmatprep.subr.bf16.mxu0 0
        %485 = vmatpush1.bf16.msra.mxu0 %v468
        %486 = vmatprep.subr.bf16.mxu0 0
        %487 = vmatpush1.bf16.msra.mxu0 %v469
        %488 = vmatprep.subr.bf16.mxu0 0
        %489 = vmatpush1.bf16.msra.mxu0 %v470
        %490 = vmatprep.subr.bf16.mxu0 0
        %491 = vmatpush1.bf16.msra.mxu0 %v471
        %492 = vmatprep.subr.bf16.mxu0 0
        %493 = vmatpush1.bf16.msra.mxu0 %v472
        %494 = vmatprep.subr.bf16.mxu0 0
        %495 = vmatpush1.bf16.msra.mxu0 %v473
        %496 = vmatprep.subr.bf16.mxu0 0
        %497 = vmatpush1.bf16.msra.mxu0 %v474
        %498 = vmatprep.subr.bf16.mxu0 0
        %499 = vmatpush1.bf16.msra.mxu0 %v475
        %500 = vmatprep.subr.bf16.mxu0 0
        %501 = vmatpush1.bf16.msra.mxu0 0
        %502 = vmatprep.subr.bf16.mxu0 0
        %503 = vmatpush1.bf16.msra.mxu0 0
        %504 = vmatprep.subr.bf16.mxu0 0
        %505 = vmatpush1.bf16.msra.mxu0 0
        %506 = vmatprep.subr.bf16.mxu0 0
        %507 = vmatpush1.bf16.msra.mxu0 0
        %508 = vmatprep.subr.bf16.mxu0 0
        %509 = vmatpush1.bf16.msra.mxu0 0
        %510 = vmatprep.subr.bf16.mxu0 0
        %511 = vmatpush1.bf16.msra.mxu0 0
        %512 = vmatprep.subr.bf16.mxu0 0
        %513 = vmatpush1.bf16.msra.mxu0 0
        %514 = vmatprep.subr.bf16.mxu0 0
        %515 = vmatpush1.bf16.msra.mxu0 0
        %516 = vmatprep.mubr.bf16.mxu0 0
        %517 = vmatmul.mubr.bf16.gmra.mrb[0].mxu0 %v419
        %v518 = vpop.f32.mrb[0].mxu0
        %v519 = vadd.f32 0.0, %v518
        %v520 = vpop.f32.mrb[0].mxu0
        %v521 = vpop.f32.mrb[0].mxu0
        %v522 = vpop.f32.mrb[0].mxu0
        %523 = vdwg.mxu0
        %v524 = vadd.f32 %v418, %v519
        %525 = vst [vmem:[#allocation8] sm:$0xff] %v524
        // Predicated region
        $region53: #{tpu_custom_call.1} parent=35 // pred_check
          %p526 = pneg %p132
        $region54: #{tpu_custom_call.1} parent=35 // pred_check_branch
          %528 = sbr.rel (%p526) target = $region56
        $region55: #{tpu_custom_call.1} parent=35 // pred_region
          %s530 = ssub.s32 128, 128
          %531 = vsyncadd [#allocation4], %s530
          %s533 = sshll.u32 [#allocation8], 4
          %s534 = int_to_ptr.vmem [resolvable:$true] %s533
          %536 = dma.vmem_to_hbm [thread:$0]  %s534, 128, %s4, [#allocation4]
        $region56: #{tpu_custom_call.1} parent=35 // pred_fallthru
          _
        // Predicated region
        $region57: #{tpu_custom_call.1} parent=35 // pred_check
          %p537 = pneg %p132
        $region58: #{tpu_custom_call.1} parent=35 // pred_check_branch
          %539 = sbr.rel (%p537) target = $region60
        $region59: #{tpu_custom_call.1} parent=35 // pred_region
          %540 = dma.done [#allocation4], 128
        $region60: #{tpu_custom_call.1} parent=35 // pred_fallthru
          _
      $region36: #{tpu_custom_call.1} parent=5 // pred_fallthru
        _
      %p541 = scmp.le.s32.totalorder 2, %s15
      // Predicated region
      $region61: #{tpu_custom_call.1} parent=5 // pred_check
        %p542 = pneg %p541
      $region62: #{tpu_custom_call.1} parent=5 // pred_check_branch
        %544 = sbr.rel (%p542) target = $region64
      $region63: #{tpu_custom_call.1} parent=5 // pred_region
        %s545 = ssub.s32 %s15, 2
      $region64: #{tpu_custom_call.1} parent=5 // pred_fallthru
        _
    $region6: #{tpu_custom_call.1} parent=1 // loop_footer
      %s19 = sadd.s32 1, %s15
    $region7: #{tpu_custom_call.1} parent=1 // loop_footer_branch
      %14 = sbr.rel target = $region3
    $region8: #{tpu_custom_call.1} parent=1 // loop_exit
      _
    %546 = vsyncpa [#allocation3], 1
    %s547 = scalar_lea.sflag [#allocation3], 1
    %548 = vsyncpa %s547, 1
    %549 = vsyncpa [#allocation6], 1
    %s550 = scalar_lea.sflag [#allocation6], 1
    %551 = vsyncpa %s550, 1
    %552 = vsyncpa [#allocation4], 1
    %s553 = scalar_lea.sflag [#allocation4], 1
    %554 = vsyncpa %s553, 1

</llo_original>
